<compile_context>
chip_gen: v7x
topology: tpu7x:2x2x1
jax: 0.10.0
libtpu: 0.0.40
codegen_flags: <defaults>
</compile_context>

<pallas_src>
import functools

import jax
import jax.numpy as jnp
from jax.experimental import pallas as pl
from jax.experimental.pallas import tpu as pltpu

LANE = 128
SUBLANE = 8
MAX_TILE_R = 1024   # (4, 1024, 128) f32 block = 2 MiB; double-buffered = 4 MiB (safe on all gens)
CORE_SPLIT = 2      # leading "parallel" axis: both TCs on v7x, plain loop on v5e/v6e


def _round_up(x, m):
    return ((x + m - 1) // m) * m


def _as_static_exponent(e):
    # Keep integer-valued exponents as Python ints so `x ** e` lowers to
    # integer_pow (cheap multiplies) instead of exp(log(x)*e) on the EUP.
    if isinstance(e, float) and e.is_integer():
        return int(e)
    return e


def _head_center_loss_kernel(x_ref, loss_ref, pos_ref, *, beta, gamma):
    # x_ref:   (4, TILE_R, 128)  channels = [pred_logit, target0, target1, target2]
    # loss_ref/pos_ref: (1, 8, 128) resident partial-sum accumulators (per core split)
    @pl.when(pl.program_id(1) == 0)
    def _():
        loss_ref[...] = jnp.zeros_like(loss_ref)
        pos_ref[...] = jnp.zeros_like(pos_ref)

    p_logit = x_ref[0].astype(jnp.float32)
    t0 = x_ref[1].astype(jnp.float32)
    t1 = x_ref[2].astype(jnp.float32)
    t2 = x_ref[3].astype(jnp.float32)

    p = jax.nn.sigmoid(p_logit)                      # pred_sigmoid[:, 0]
    positives = t2                                   # target[:, 2]
    negatives = t1 - t2                              # target[:, 1] - target[:, 2]

    fg_w = positives * (1.0 - p) ** gamma
    bg_w = negatives * (1.0 - t0) ** beta * p ** gamma
    focal_weight = fg_w + bg_w

    # F.binary_cross_entropy(pred_sigmoid, target, reduction='none'):
    # PyTorch clamps each log term at -100.
    log_p = jnp.maximum(jnp.log(p), -100.0)
    log_1mp = jnp.maximum(jnp.log(1.0 - p), -100.0)
    bce = -(t2 * log_p + (1.0 - t2) * log_1mp)

    val = focal_weight * bce                         # (TILE_R, 128)

    # Fold (TILE_R, 128) -> (8, 128) with pure vector adds (no XLU reduce,
    # no masked scalar store per step); final scalar sum happens in the wrapper.
    loss_ref[...] += val.reshape(-1, SUBLANE, LANE).sum(axis=0)[None, :, :]
    pos_ref[...] += t2.reshape(-1, SUBLANE, LANE).sum(axis=0)[None, :, :]


def head_center_loss_pallas(pred, target, *, beta=4, gamma=2, loss_weight=0.01):
    beta = _as_static_exponent(beta)
    gamma = _as_static_exponent(gamma)

    N, _, H, W = pred.shape
    total = N * H * W
    dt = jnp.promote_types(pred.dtype, target.dtype)   # keep native dtype; kernel upcasts to f32

    rows = pl.cdiv(total, LANE)
    tile_r = max(SUBLANE, min(MAX_TILE_R, _round_up(rows, SUBLANE)))
    rows_p = _round_up(rows, CORE_SPLIT * tile_r)
    steps_per_core = rows_p // (CORE_SPLIT * tile_r)
    padded_total = rows_p * LANE

    # Single concatenated pad into a channel-major (4, rows_p, 128) slab.
    # TODO(synk): a fully copy-free path (tiling the original NCHW layout directly)
    # would avoid this one materialization; the single fused pad keeps it to one pass.
    pred_flat = pred.astype(dt).reshape(1, total)
    tgt_flat = jnp.transpose(target.astype(dt), (1, 0, 2, 3)).reshape(3, total)
    slab = jnp.concatenate([pred_flat, tgt_flat], axis=0)
    slab = jnp.pad(slab, ((0, 0), (0, padded_total - total)))
    slab = slab.reshape(4, rows_p, LANE)

    in_spec = pl.BlockSpec(
        (4, tile_r, LANE),
        lambda c, i: (0, c * steps_per_core + i, 0))
    out_spec = pl.BlockSpec((1, SUBLANE, LANE), lambda c, i: (c, 0, 0))

    loss_parts, pos_parts = pl.pallas_call(
        functools.partial(_head_center_loss_kernel, beta=beta, gamma=gamma),
        out_shape=(jax.ShapeDtypeStruct((CORE_SPLIT, SUBLANE, LANE), jnp.float32),
                   jax.ShapeDtypeStruct((CORE_SPLIT, SUBLANE, LANE), jnp.float32)),
        grid_spec=pltpu.PrefetchScalarGridSpec(
            num_scalar_prefetch=0,
            grid=(CORE_SPLIT, steps_per_core),
            in_specs=[in_spec],
            out_specs=[out_spec, out_spec],
        ),
        compiler_params=pltpu.CompilerParams(
            dimension_semantics=("parallel", "arbitrary")),
    )(slab)

    loss_sum = jnp.sum(loss_parts)
    pos_sum = jnp.sum(pos_parts)
    pos_nums = jnp.maximum(1.0, pos_sum)             # max(1.0, assigned_boxes)
    return loss_weight * loss_sum / pos_nums


def head_center_loss_ref(pred, target, *, beta=4, gamma=2, loss_weight=0.01):
    """Pure-JAX reference mirroring the PyTorch code."""
    p = jax.nn.sigmoid(pred.astype(jnp.float32))[:, 0]
    t0 = target[:, 0].astype(jnp.float32)
    t1 = target[:, 1].astype(jnp.float32)
    t2 = target[:, 2].astype(jnp.float32)
    fg = t2 * (1.0 - p) ** gamma
    bg = (t1 - t2) * (1.0 - t0) ** beta * p ** gamma
    focal = fg + bg
    bce = -(t2 * jnp.maximum(jnp.log(p), -100.0)
            + (1.0 - t2) * jnp.maximum(jnp.log(1.0 - p), -100.0))
    pos_nums = jnp.maximum(1.0, jnp.sum(t2))
    return loss_weight * jnp.sum(focal * bce) / pos_nums


if __name__ == "__main__":
    key = jax.random.PRNGKey(0)
    k1, k2, k3 = jax.random.split(key, 3)

    N, H, W = 2, 16, 16
    # pred: raw logits, 1 channel. target: 3 channels in [0, 1], channel 2 sparse/binary.
    pred = jax.random.normal(k1, (N, 1, H, W), dtype=jnp.float32)
    t01 = jax.random.uniform(k2, (N, 2, H, W), dtype=jnp.float32)
    t2 = (jax.random.uniform(k3, (N, 1, H, W)) > 0.9).astype(jnp.float32)
    # ensure target[:,1] >= target[:,2] (negatives nonnegative), like gaussian heatmaps
    t1 = jnp.maximum(t01[:, 1:2], t2)
    target = jnp.concatenate([t01[:, 0:1], t1, t2], axis=1)

    out = head_center_loss_pallas(pred, target, beta=4, gamma=2, loss_weight=0.01)
    out = jax.block_until_ready(out)

    ref = head_center_loss_ref(pred, target, beta=4, gamma=2, loss_weight=0.01)
    assert jnp.allclose(out, ref, rtol=1e-5, atol=1e-6), (out, ref)

    print("KERNEL_OK")
</pallas_src>

<mosaic_0001>
module attributes {stable_mosaic.version = 11 : i64} {
  func.func @_head_center_loss_kernel(%arg0: i32, %arg1: i32, %arg2: memref<4x8x128xf32, #tpu.memory_space<vmem>>, %arg3: memref<1x8x128xf32, #tpu.memory_space<vmem>>, %arg4: memref<1x8x128xf32, #tpu.memory_space<vmem>>) attributes {dimension_semantics = [#tpu.dimension_semantics<parallel>, #tpu.dimension_semantics<arbitrary>], iteration_bounds = array<i64: 2, 1>, scalar_prefetch = 0 : i64, scratch_operands = 0 : i64, tpu.core_type = #tpu.core_type<tc>, window_params = [{transform_indices = @transform_0, window_bounds = array<i64: 4, 8, 128>}, {transform_indices = @transform_1, window_bounds = array<i64: 1, 8, 128>}, {transform_indices = @transform_2, window_bounds = array<i64: 1, 8, 128>}]} {
    %c0_i32 = arith.constant 0 : i32
    %0 = arith.cmpi eq, %arg1, %c0_i32 : i32
    %1 = arith.extui %0 : i1 to i32
    %c0_i32_0 = arith.constant 0 : i32
    %2 = arith.cmpi ne, %1, %c0_i32_0 : i32
    scf.if %2 {
      %cst_30 = arith.constant 0.000000e+00 : f32
      %57 = vector.broadcast %cst_30 : f32 to vector<1x8x128xf32>
      %c0_31 = arith.constant 0 : index
      %c0_32 = arith.constant 0 : index
      %c0_33 = arith.constant 0 : index
      %58 = vector.load %arg3[%c0_31, %c0_32, %c0_33] : memref<1x8x128xf32, #tpu.memory_space<vmem>>, vector<1x8x128xf32>
      tpu.vector_store %arg3[%c0_31, %c0_32, %c0_33], %57 {strides = array<i32>} : memref<1x8x128xf32, #tpu.memory_space<vmem>>, vector<1x8x128xf32>,
      %cst_34 = arith.constant 0.000000e+00 : f32
      %59 = vector.broadcast %cst_34 : f32 to vector<1x8x128xf32>
      %c0_35 = arith.constant 0 : index
      %c0_36 = arith.constant 0 : index
      %c0_37 = arith.constant 0 : index
      %60 = vector.load %arg4[%c0_35, %c0_36, %c0_37] : memref<1x8x128xf32, #tpu.memory_space<vmem>>, vector<1x8x128xf32>
      tpu.vector_store %arg4[%c0_35, %c0_36, %c0_37], %59 {strides = array<i32>} : memref<1x8x128xf32, #tpu.memory_space<vmem>>, vector<1x8x128xf32>,
    } else {
    }
    %c0 = arith.constant 0 : index
    %c0_1 = arith.constant 0 : index
    %c0_2 = arith.constant 0 : index
    %3 = vector.load %arg2[%c0, %c0_1, %c0_2] : memref<4x8x128xf32, #tpu.memory_space<vmem>>, vector<1x8x128xf32>
    %4 = vector.shape_cast %3 : vector<1x8x128xf32> to vector<8x128xf32>
    %c1 = arith.constant 1 : index
    %c0_3 = arith.constant 0 : index
    %c0_4 = arith.constant 0 : index
    %5 = vector.load %arg2[%c1, %c0_3, %c0_4] : memref<4x8x128xf32, #tpu.memory_space<vmem>>, vector<1x8x128xf32>
    %6 = vector.shape_cast %5 : vector<1x8x128xf32> to vector<8x128xf32>
    %c2 = arith.constant 2 : index
    %c0_5 = arith.constant 0 : index
    %c0_6 = arith.constant 0 : index
    %7 = vector.load %arg2[%c2, %c0_5, %c0_6] : memref<4x8x128xf32, #tpu.memory_space<vmem>>, vector<1x8x128xf32>
    %8 = vector.shape_cast %7 : vector<1x8x128xf32> to vector<8x128xf32>
    %c3 = arith.constant 3 : index
    %c0_7 = arith.constant 0 : index
    %c0_8 = arith.constant 0 : index
    %9 = vector.load %arg2[%c3, %c0_7, %c0_8] : memref<4x8x128xf32, #tpu.memory_space<vmem>>, vector<1x8x128xf32>
    %10 = vector.shape_cast %9 : vector<1x8x128xf32> to vector<8x128xf32>
    %11 = arith.negf %4 : vector<8x128xf32>
    %12 = math.exp %11 : vector<8x128xf32>
    %cst = arith.constant 1.000000e+00 : f32
    %13 = vector.broadcast %cst : f32 to vector<8x128xf32>
    %14 = arith.addf %13, %12 : vector<8x128xf32>
    %15 = arith.divf %13, %14 : vector<8x128xf32>
    %16 = arith.subf %8, %10 : vector<8x128xf32>
    %cst_9 = arith.constant 1.000000e+00 : f32
    %17 = vector.broadcast %cst_9 : f32 to vector<8x128xf32>
    %18 = arith.subf %17, %15 : vector<8x128xf32>
    %19 = arith.mulf %18, %18 : vector<8x128xf32>
    %20 = arith.mulf %10, %19 : vector<8x128xf32>
    %cst_10 = arith.constant 1.000000e+00 : f32
    %21 = vector.broadcast %cst_10 : f32 to vector<8x128xf32>
    %22 = arith.subf %21, %6 : vector<8x128xf32>
    %23 = arith.mulf %22, %22 : vector<8x128xf32>
    %24 = arith.mulf %23, %23 : vector<8x128xf32>
    %25 = arith.mulf %16, %24 : vector<8x128xf32>
    %26 = arith.mulf %15, %15 : vector<8x128xf32>
    %27 = arith.mulf %25, %26 : vector<8x128xf32>
    %28 = arith.addf %20, %27 : vector<8x128xf32>
    %29 = math.log %15 : vector<8x128xf32>
    %cst_11 = arith.constant -1.000000e+02 : f32
    %30 = vector.broadcast %cst_11 : f32 to vector<8x128xf32>
    %31 = arith.maximumf %29, %30 : vector<8x128xf32>
    %cst_12 = arith.constant 1.000000e+00 : f32
    %32 = vector.broadcast %cst_12 : f32 to vector<8x128xf32>
    %33 = arith.subf %32, %15 : vector<8x128xf32>
    %34 = math.log %33 : vector<8x128xf32>
    %cst_13 = arith.constant -1.000000e+02 : f32
    %35 = vector.broadcast %cst_13 : f32 to vector<8x128xf32>
    %36 = arith.maximumf %34, %35 : vector<8x128xf32>
    %37 = arith.mulf %10, %31 : vector<8x128xf32>
    %cst_14 = arith.constant 1.000000e+00 : f32
    %38 = vector.broadcast %cst_14 : f32 to vector<8x128xf32>
    %39 = arith.subf %38, %10 : vector<8x128xf32>
    %40 = arith.mulf %39, %36 : vector<8x128xf32>
    %41 = arith.addf %37, %40 : vector<8x128xf32>
    %cst_15 = arith.constant 0.000000e+00 : f32
    %42 = vector.broadcast %cst_15 : f32 to vector<8x128xf32>
    %43 = arith.subf %42, %41 : vector<8x128xf32>
    %44 = arith.mulf %28, %43 : vector<8x128xf32>
    %c0_16 = arith.constant 0 : index
    %c0_17 = arith.constant 0 : index
    %c0_18 = arith.constant 0 : index
    %45 = vector.load %arg3[%c0_16, %c0_17, %c0_18] : memref<1x8x128xf32, #tpu.memory_space<vmem>>, vector<1x8x128xf32>
    %46 = vector.shape_cast %44 : vector<8x128xf32> to vector<1x8x128xf32>
    %cst_19 = arith.constant dense<0.000000e+00> : vector<8x128xf32>
    %47 = vector.multi_reduction <add>, %46, %cst_19 [0] : vector<1x8x128xf32> to vector<8x128xf32>
    %48 = vector.shape_cast %47 : vector<8x128xf32> to vector<1x8x128xf32>
    %49 = arith.addf %45, %48 : vector<1x8x128xf32>
    %c0_20 = arith.constant 0 : index
    %c0_21 = arith.constant 0 : index
    %c0_22 = arith.constant 0 : index
    %50 = vector.load %arg3[%c0_20, %c0_21, %c0_22] : memref<1x8x128xf32, #tpu.memory_space<vmem>>, vector<1x8x128xf32>
    tpu.vector_store %arg3[%c0_20, %c0_21, %c0_22], %49 {strides = array<i32>} : memref<1x8x128xf32, #tpu.memory_space<vmem>>, vector<1x8x128xf32>,
    %c0_23 = arith.constant 0 : index
    %c0_24 = arith.constant 0 : index
    %c0_25 = arith.constant 0 : index
    %51 = vector.load %arg4[%c0_23, %c0_24, %c0_25] : memref<1x8x128xf32, #tpu.memory_space<vmem>>, vector<1x8x128xf32>
    %52 = vector.shape_cast %10 : vector<8x128xf32> to vector<1x8x128xf32>
    %cst_26 = arith.constant dense<0.000000e+00> : vector<8x128xf32>
    %53 = vector.multi_reduction <add>, %52, %cst_26 [0] : vector<1x8x128xf32> to vector<8x128xf32>
    %54 = vector.shape_cast %53 : vector<8x128xf32> to vector<1x8x128xf32>
    %55 = arith.addf %51, %54 : vector<1x8x128xf32>
    %c0_27 = arith.constant 0 : index
    %c0_28 = arith.constant 0 : index
    %c0_29 = arith.constant 0 : index
    %56 = vector.load %arg4[%c0_27, %c0_28, %c0_29] : memref<1x8x128xf32, #tpu.memory_space<vmem>>, vector<1x8x128xf32>
    tpu.vector_store %arg4[%c0_27, %c0_28, %c0_29], %55 {strides = array<i32>} : memref<1x8x128xf32, #tpu.memory_space<vmem>>, vector<1x8x128xf32>,
    return
  }
  func.func @transform_0(%arg0: i32, %arg1: i32) -> (i32, i32, i32) {
    %c1_i32 = arith.constant 1 : i32
    %0 = arith.muli %arg0, %c1_i32 : i32
    %1 = arith.addi %0, %arg1 : i32
    %c0_i32 = arith.constant 0 : i32
    %c0_i32_0 = arith.constant 0 : i32
    %c0_i32_1 = arith.constant 0 : i32
    return %c0_i32, %1, %c0_i32_0 : i32, i32, i32
  }
  func.func @transform_1(%arg0: i32, %arg1: i32) -> (i32, i32, i32) {
    %c0_i32 = arith.constant 0 : i32
    %c0_i32_0 = arith.constant 0 : i32
    %c0_i32_1 = arith.constant 0 : i32
    return %arg0, %c0_i32, %c0_i32_0 : i32, i32, i32
  }
  func.func @transform_2(%arg0: i32, %arg1: i32) -> (i32, i32, i32) {
    %c0_i32 = arith.constant 0 : i32
    %c0_i32_0 = arith.constant 0 : i32
    %c0_i32_1 = arith.constant 0 : i32
    return %arg0, %c0_i32, %c0_i32_0 : i32, i32, i32
  }
}

</mosaic_0001>

<llo_original>
// kernel: tpu_custom_call.1
$region0: #{tpu_custom_call.1}
  #allocation0 [shape = 'u32[]', space=smem, size = 0x4, offset = 0x4, fixed_abs, tag = 'smem constant byte address 0x4 - core index']
  #allocation1 [shape = 'u32[144,128]{1,0:T(1,128)}', space=vmem, size = 0x12000, scoped, tag = 'internal scratch']
  %s0 = inlined_call_operand.hbm [shape: f32[4,16,128], index: 0, kind: input, shape index: {}]
  %s1 = inlined_call_operand.hbm [shape: f32[2,8,128], index: 1, kind: output, shape index: {0}]
  %s2 = inlined_call_operand.hbm [shape: f32[2,8,128], index: 2, kind: output, shape index: {1}]
  %3 = xla_tuple %s1, %s2
  %s4 = sld [smem:[#allocation0]]
  $region53: #{tpu_custom_call.1} parent=0
    _
  %s6 = ssub.s32 1, %s4
  %s7 = scalar_select 0, %s6, %s4
  $region1: #{tpu_custom_call.1} parent=0
    #allocation2 [shape = 'u8[32768]{0}', space=vmem, size = 0x8000, scoped, tag = 'input window, operand 0']
    #allocation3 [shape = 's32[2]{0}', space=sflag, size = 0x8, scoped, tag = 'scoped memory for tpu_custom_call.1']
    #allocation4 [shape = 's32[2]{0}', space=sflag, size = 0x8, scoped, tag = 'scoped memory for tpu_custom_call.1']
    #allocation5 [shape = 'u8[8192]{0}', space=vmem, size = 0x2000, scoped, tag = 'output window, operand 0']
    #allocation6 [shape = 'u8[8192]{0}', space=vmem, size = 0x2000, scoped, tag = 'output window, operand 1']
    #allocation7 [shape = 's32[2]{0}', space=sflag, size = 0x8, scoped, tag = 'scoped memory for tpu_custom_call.1']
    %8 = vsyncpa [#allocation3], 0
    %s9 = scalar_lea.sflag [#allocation3], 1
    %10 = vsyncpa %s9, 0
    %11 = vsyncpa [#allocation4], 0
    %s12 = scalar_lea.sflag [#allocation4], 1
    %13 = vsyncpa %s12, 0
    %14 = vsyncpa [#allocation7], 0
    %s15 = scalar_lea.sflag [#allocation7], 1
    %16 = vsyncpa %s15, 0
    loop: start=0, step=1, limit=4
    $region2: #{tpu_custom_call.1} parent=1 // loop_pre_header
      _
    $region3: #{tpu_custom_call.1} parent=1 // loop_header
      %s18 = sphi 0, %s22
      %p19 = scmp.ge.s32.totalorder %s18, 4
      %s25 = sphi 0, %s37
      %s26 = sphi 0, %s33
      %s27 = sphi 0, %s25
      %s28 = sphi 0, %s26
      %s29 = sphi 0, %s27
      %s30 = sphi 0, %s28
      %s42 = sphi 0, %s44
      %s45 = sphi 0, %s42
      %s46 = sphi 0, %s45
      %s62 = sphi 0, %s46
      %s68 = sphi 0, %s70
      %s71 = sphi 0, %s68
      %s72 = sphi 0, %s71
      %s88 = sphi 0, %s72
      %s94 = sphi 0, %s96
      %s97 = sphi 0, %s94
      %s98 = sphi 0, %s97
      %s114 = sphi 0, %s98
    $region4: #{tpu_custom_call.1} parent=1 // loop_header_branch
      %21 = sbr.rel (%p19) target = $region8
    $region5: #{tpu_custom_call.1} parent=1 // loop_body
      %s23 = ssub.s32 %s18, 1
      %s24 = ssub.s32 %s18, 2
      %s31 = sadd.s32 1, %s26
      %p32 = scmp.ge.s32.totalorder %s31, 1
      %s33 = scalar_select %p32, 0, %s31
      %s34 = sadd.s32 1, %s25
      %s35 = scalar_select %p32, %s34, %s25
      %p36 = scmp.ge.s32.totalorder %s35, 2
      %s37 = scalar_select %p36, 0, %s35
      %s38 = sadd.s32 %s25, %s26
      %s39 = sadd.s32 %s37, %s33
      %s40 = ssub.s32 %s38, %s39
      %p41 = scmp.eq.s32.totalorder %s40, 0
      %s43 = sadd.s32 %s42, 1
      %s44 = scalar_select %p41, %s42, %s43
      %p47 = pneg %p41
      %p48 = scmp.eq.s32.totalorder %s18, 1
      %p49 = por %p47, %p48
      %p50 = scmp.ne.s32.totalorder %s42, %s45
      %p51 = scmp.eq.s32.totalorder %s18, 0
      %p52 = por %p50, %p51
      %p53 = scmp.ne.s32.totalorder %s42, %s45
      %p54 = scmp.eq.s32.totalorder %s23, 1
      %p55 = por %p53, %p54
      %p56 = scmp.ne.s32.totalorder %s45, %s46
      %p57 = scmp.eq.s32.totalorder %s23, 0
      %p58 = por %p56, %p57
      %p59 = scmp.ne.s32.totalorder %s45, %s46
      %p60 = scmp.eq.s32.totalorder %s24, 1
      %p61 = por %p59, %p60
      %p63 = scmp.ne.s32.totalorder %s46, %s62
      %p64 = scmp.eq.s32.totalorder %s24, 0
      %p65 = por %p63, %p64
      %s66 = ssub.s32 %s25, %s37
      %p67 = scmp.eq.s32.totalorder %s66, 0
      %s69 = sadd.s32 %s68, 1
      %s70 = scalar_select %p67, %s68, %s69
      %p73 = pneg %p67
      %p74 = scmp.eq.s32.totalorder %s18, 1
      %p75 = por %p73, %p74
      %p76 = scmp.ne.s32.totalorder %s68, %s71
      %p77 = scmp.eq.s32.totalorder %s18, 0
      %p78 = por %p76, %p77
      %p79 = scmp.ne.s32.totalorder %s68, %s71
      %p80 = scmp.eq.s32.totalorder %s23, 1
      %p81 = por %p79, %p80
      %p82 = scmp.ne.s32.totalorder %s71, %s72
      %p83 = scmp.eq.s32.totalorder %s23, 0
      %p84 = por %p82, %p83
      %p85 = scmp.ne.s32.totalorder %s71, %s72
      %p86 = scmp.eq.s32.totalorder %s24, 1
      %p87 = por %p85, %p86
      %p89 = scmp.ne.s32.totalorder %s72, %s88
      %p90 = scmp.eq.s32.totalorder %s24, 0
      %p91 = por %p89, %p90
      %s92 = ssub.s32 %s25, %s37
      %p93 = scmp.eq.s32.totalorder %s92, 0
      %s95 = sadd.s32 %s94, 1
      %s96 = scalar_select %p93, %s94, %s95
      %p99 = pneg %p93
      %p100 = scmp.eq.s32.totalorder %s18, 1
      %p101 = por %p99, %p100
      %p102 = scmp.ne.s32.totalorder %s94, %s97
      %p103 = scmp.eq.s32.totalorder %s18, 0
      %p104 = por %p102, %p103
      %p105 = scmp.ne.s32.totalorder %s94, %s97
      %p106 = scmp.eq.s32.totalorder %s23, 1
      %p107 = por %p105, %p106
      %p108 = scmp.ne.s32.totalorder %s97, %s98
      %p109 = scmp.eq.s32.totalorder %s23, 0
      %p110 = por %p108, %p109
      %p111 = scmp.ne.s32.totalorder %s97, %s98
      %p112 = scmp.eq.s32.totalorder %s24, 1
      %p113 = por %p111, %p112
      %p115 = scmp.ne.s32.totalorder %s98, %s114
      %p116 = scmp.eq.s32.totalorder %s24, 0
      %p117 = por %p115, %p116
      %p118 = scmp.le.s32.totalorder 1, %s18
      %p119 = scmp.lt.s32.totalorder %s18, 3
      %p120 = pnand %p118, %p119
      %p121 = pneg %p120
      // Predicated region
      $region9: #{tpu_custom_call.1} parent=5 // pred_check
        _
      $region10: #{tpu_custom_call.1} parent=5 // pred_check_branch
        %123 = sbr.rel (%p120) target = $region12
      $region11: #{tpu_custom_call.1} parent=5 // pred_region
        %s124 = ssub.s32 %s18, 1
      $region12: #{tpu_custom_call.1} parent=5 // pred_fallthru
        _
      %p125 = scmp.lt.s32.totalorder %s18, 2
      // Predicated region
      $region13: #{tpu_custom_call.1} parent=5 // pred_check
        %p126 = pneg %p125
      $region14: #{tpu_custom_call.1} parent=5 // pred_check_branch
        %128 = sbr.rel (%p126) target = $region16
      $region15: #{tpu_custom_call.1} parent=5 // pred_region
        // Predicated region
        $region17: #{tpu_custom_call.1} parent=15 // pred_check
          %p129 = pneg %p52
        $region18: #{tpu_custom_call.1} parent=15 // pred_check_branch
          %131 = sbr.rel (%p129) target = $region20
        $region19: #{tpu_custom_call.1} parent=15 // pred_region
          %s132 = sand.u32 %s42, 1
          %s133 = scalar_lea.sflag [#allocation3], %s132
          %s134 = sand.u32 %s42, 1
          %s135 = smul.addr %s134, 32
          %s136 = scalar_lea.vmem [#allocation2], %s135
          %s137 = sadd.s32 %s25, %s26
          %s139 = ssub.s32 512, 512
          %140 = vsyncadd %s133, %s139
          %s141 = smul.addr %s137, 128
          %s142 = scalar_lea.hbm %s0, %s141
          %s143 = sshll.u32 %s136, 4
          %s144 = int_to_ptr.vmem [resolvable:$true] %s143
          %149 = dma.hbm_to_vmem [thread:$0]  %s142, 512, %s144, %s133, 256, 128, 8
        $region20: #{tpu_custom_call.1} parent=15 // pred_fallthru
          _
      $region16: #{tpu_custom_call.1} parent=5 // pred_fallthru
        _
      %p150 = scmp.le.s32.totalorder 1, %s18
      %p151 = scmp.lt.s32.totalorder %s18, 3
      %p152 = pnand %p150, %p151
      %p153 = pneg %p152
      // Predicated region
      $region21: #{tpu_custom_call.1} parent=5 // pred_check
        _
      $region22: #{tpu_custom_call.1} parent=5 // pred_check_branch
        %155 = sbr.rel (%p152) target = $region24
      $region23: #{tpu_custom_call.1} parent=5 // pred_region
        %s156 = ssub.s32 %s18, 1
        %s157 = sand.u32 %s45, 1
        %s158 = scalar_lea.sflag [#allocation3], %s157
        %s159 = sand.u32 %s45, 1
        %s160 = smul.addr %s159, 32
        %s161 = scalar_lea.vmem [#allocation2], %s160
        // Predicated region
        $region25: #{tpu_custom_call.1} parent=23 // pred_check
          %p162 = pneg %p58
        $region26: #{tpu_custom_call.1} parent=23 // pred_check_branch
          %164 = sbr.rel (%p162) target = $region28
        $region27: #{tpu_custom_call.1} parent=23 // pred_region
          %165 = dma.done %s158, 512
        $region28: #{tpu_custom_call.1} parent=23 // pred_fallthru
          _
        %s166 = sand.u32 %s45, 1
        %s167 = scalar_lea.sflag [#allocation3], %s166
        %s168 = sand.u32 %s45, 1
        %s169 = smul.addr %s168, 32
        %s170 = scalar_lea.vmem [#allocation2], %s169
        %p171 = pneg %p58
        %p172 = pneg %p55
        %p173 = pneg %p84
        %p174 = pneg %p81
        %s175 = sand.u32 %s71, 1
        %s176 = scalar_lea.sflag [#allocation4], %s175
        %s177 = sand.u32 %s71, 1
        %s178 = smul.addr %s177, 8
        %s179 = scalar_lea.vmem [#allocation5], %s178
        %p180 = pneg %p110
        %p181 = pneg %p107
        %s182 = sand.u32 %s97, 1
        %s183 = scalar_lea.sflag [#allocation7], %s182
        %s184 = sand.u32 %s97, 1
        %s185 = smul.addr %s184, 8
        %s186 = scalar_lea.vmem [#allocation6], %s185
        %s187 = sadd.s32 %s27, %s28
        %p188 = scmp.eq.s32.totalorder %s28, 0
        // Predicated region
        $region29: #{tpu_custom_call.1} parent=23 // pred_check
          %p189 = pneg %p188
        $region30: #{tpu_custom_call.1} parent=23 // pred_check_branch
          %191 = sbr.rel (%p189) target = $region32
        $region31: #{tpu_custom_call.1} parent=23 // pred_region
          %192 = vst [vmem:[%s179] sm:$0xff] 0.0
          %193 = vst [vmem:[%s186] sm:$0xff] 0.0
        $region32: #{tpu_custom_call.1} parent=23 // pred_fallthru
          _
        %v194 = vld [vmem:[%s161] sm:$0xff]
        %s195 = scalar_lea.vmem %s161, 8 [#allocation2]
        %v196 = vld [vmem:[%s195] sm:$0xff]
        %s197 = scalar_lea.vmem %s161, 16 [#allocation2]
        %v198 = vld [vmem:[%s197] sm:$0xff]
        %s199 = scalar_lea.vmem %s161, 24 [#allocation2]
        %v200 = vld [vmem:[%s199] sm:$0xff]
        %v201 = vxor.u32 %v194, 2147483648
        %v202 = vmul.f32 %v201, 1.442695
        %v203 = vpow.pop %v202
        %v204 = vadd.f32 %v203, 1.0
        %v205 = vrcp.pop %v204
        %v206 = vmul.f32 1.0, %v205
        %v207 = vsub.f32 %v198, %v200
        %v208 = vsub.f32 1.0, %v206
        %v209 = vmul.f32 %v208, %v208
        %v210 = vmul.f32 %v200, %v209
        %v211 = vsub.f32 1.0, %v196
        %v212 = vmul.f32 %v211, %v211
        %v213 = vmul.f32 %v212, %v212
        %v214 = vmul.f32 %v207, %v213
        %v215 = vmul.f32 %v206, %v206
        %v216 = vmul.f32 %v214, %v215
        %v217 = vadd.f32 %v210, %v216
        %v218 = vlog2.pop %v206
        %v219 = vmul.f32 %v218, 0.6931472
        %v220 = vmax.f32 %v219, -100.0
        %v221 = vlog2.pop %v208
        %v222 = vmul.f32 %v221, 0.6931472
        %v223 = vmax.f32 %v222, -100.0
        %v224 = vmul.f32 %v200, %v220
        %v225 = vsub.f32 1.0, %v200
        %v226 = vmul.f32 %v225, %v223
        %v227 = vadd.f32 %v224, %v226
        %v228 = vsub.f32 0.0, %v227
        %v229 = vmul.f32 %v217, %v228
        %v230 = vld [vmem:[%s179] sm:$0xff]
        %v231 = vadd.f32 %v229, 0.0
        %v232 = vadd.f32 %v230, %v231
        %233 = vst [vmem:[%s179] sm:$0xff] %v232
        %v234 = vld [vmem:[%s186] sm:$0xff]
        %v235 = vadd.f32 %v200, 0.0
        %v236 = vadd.f32 %v234, %v235
        %237 = vst [vmem:[%s186] sm:$0xff] %v236
        %s238 = sand.u32 %s71, 1
        %s239 = scalar_lea.sflag [#allocation4], %s238
        %s240 = sand.u32 %s71, 1
        %s241 = smul.addr %s240, 8
        %s242 = scalar_lea.vmem [#allocation5], %s241
        %s243 = sand.u32 %s97, 1
        %s244 = scalar_lea.sflag [#allocation7], %s243
        %s245 = sand.u32 %s97, 1
        %s246 = smul.addr %s245, 8
        %s247 = scalar_lea.vmem [#allocation6], %s246
        // Predicated region
        $region33: #{tpu_custom_call.1} parent=23 // pred_check
          %p248 = pneg %p81
        $region34: #{tpu_custom_call.1} parent=23 // pred_check_branch
          %250 = sbr.rel (%p248) target = $region36
        $region35: #{tpu_custom_call.1} parent=23 // pred_region
          %s252 = ssub.s32 128, 128
          %253 = vsyncadd %s239, %s252
          %s254 = smul.addr %s27, 128
          %s255 = scalar_lea.hbm %s1, %s254
          %s257 = sshll.u32 %s242, 4
          %s258 = int_to_ptr.vmem [resolvable:$true] %s257
          %260 = dma.vmem_to_hbm [thread:$0]  %s258, 128, %s255, %s239
        $region36: #{tpu_custom_call.1} parent=23 // pred_fallthru
          _
        // Predicated region
        $region37: #{tpu_custom_call.1} parent=23 // pred_check
          %p261 = pneg %p107
        $region38: #{tpu_custom_call.1} parent=23 // pred_check_branch
          %263 = sbr.rel (%p261) target = $region40
        $region39: #{tpu_custom_call.1} parent=23 // pred_region
          %s265 = ssub.s32 128, 128
          %266 = vsyncadd %s244, %s265
          %s267 = smul.addr %s27, 128
          %s268 = scalar_lea.hbm %s2, %s267
          %s270 = sshll.u32 %s247, 4
          %s271 = int_to_ptr.vmem [resolvable:$true] %s270
          %273 = dma.vmem_to_hbm [thread:$0]  %s271, 128, %s268, %s244
        $region40: #{tpu_custom_call.1} parent=23 // pred_fallthru
          _
      $region24: #{tpu_custom_call.1} parent=5 // pred_fallthru
        _
      %p274 = scmp.le.s32.totalorder 2, %s18
      // Predicated region
      $region41: #{tpu_custom_call.1} parent=5 // pred_check
        %p275 = pneg %p274
      $region42: #{tpu_custom_call.1} parent=5 // pred_check_branch
        %277 = sbr.rel (%p275) target = $region44
      $region43: #{tpu_custom_call.1} parent=5 // pred_region
        %s278 = ssub.s32 %s18, 2
        // Predicated region
        $region45: #{tpu_custom_call.1} parent=43 // pred_check
          %p279 = pneg %p87
        $region46: #{tpu_custom_call.1} parent=43 // pred_check_branch
          %281 = sbr.rel (%p279) target = $region48
        $region47: #{tpu_custom_call.1} parent=43 // pred_region
          %s282 = sand.u32 %s72, 1
          %s283 = scalar_lea.sflag [#allocation4], %s282
          %s284 = sand.u32 %s72, 1
          %s285 = smul.addr %s284, 8
          %s286 = scalar_lea.vmem [#allocation5], %s285
          %287 = dma.done %s283, 128
        $region48: #{tpu_custom_call.1} parent=43 // pred_fallthru
          _
        // Predicated region
        $region49: #{tpu_custom_call.1} parent=43 // pred_check
          %p288 = pneg %p113
        $region50: #{tpu_custom_call.1} parent=43 // pred_check_branch
          %290 = sbr.rel (%p288) target = $region52
        $region51: #{tpu_custom_call.1} parent=43 // pred_region
          %s291 = sand.u32 %s98, 1
          %s292 = scalar_lea.sflag [#allocation7], %s291
          %s293 = sand.u32 %s98, 1
          %s294 = smul.addr %s293, 8
          %s295 = scalar_lea.vmem [#allocation6], %s294
          %296 = dma.done %s292, 128
        $region52: #{tpu_custom_call.1} parent=43 // pred_fallthru
          _
      $region44: #{tpu_custom_call.1} parent=5 // pred_fallthru
        _
    $region6: #{tpu_custom_call.1} parent=1 // loop_footer
      %s22 = sadd.s32 1, %s18
    $region7: #{tpu_custom_call.1} parent=1 // loop_footer_branch
      %17 = sbr.rel target = $region3
    $region8: #{tpu_custom_call.1} parent=1 // loop_exit
      _
    %297 = vsyncpa [#allocation3], 1
    %s298 = scalar_lea.sflag [#allocation3], 1
    %299 = vsyncpa %s298, 1
    %300 = vsyncpa [#allocation4], 1
    %s301 = scalar_lea.sflag [#allocation4], 1
    %302 = vsyncpa %s301, 1
    %303 = vsyncpa [#allocation7], 1
    %s304 = scalar_lea.sflag [#allocation7], 1
    %305 = vsyncpa %s304, 1

</llo_original>
